<compile_context>
chip_gen: v6e
topology: v6e:2x2x1
jax: 0.10.0
libtpu: 0.0.40
codegen_flags: <defaults>
</compile_context>

<pallas_src>
import functools

import jax
import jax.numpy as jnp
from jax.experimental import pallas as pl
from jax.experimental.pallas import tpu as pltpu

NEG_SLOPE = 0.01  # PyTorch nn.LeakyReLU default negative_slope


def _leaky_relu(h):
    return jnp.where(h > 0, h, NEG_SLOPE * h)


def _round_up(n, m):
    return (n + m - 1) // m * m


def _choose_tb(B, target=1024, min_steps=2):
    """Batch tile: big enough to amortize per-step overhead, but keep >= 2
    grid steps when B permits so v7x can use both TensorCores."""
    TB = min(target, _round_up(B, 8))
    if pl.cdiv(B, TB) < min_steps and B > 8 * min_steps:
        TB = max(8, _round_up(pl.cdiv(B, min_steps), 8))
    return TB


# --------------------------------------------------------------------------- #
# Kernel: fused MIR layer + statically-unrolled MLP stack.
# --------------------------------------------------------------------------- #
def tabular_feature_kernel(x_ref, vec_ref, wx_ref, wv_ref, b0_ref,
                           wmlp_ref, bmlp_ref, out_ref):
    """x_ref/vec_ref: (TB, C_in) f32     activations (cast to bf16 in VMEM)
       wx_ref/wv_ref: (C_in, H)  bf16    MIR weights (resident)
       b0_ref:        (1, H)     f32     MIR bias
       wmlp_ref:      (L, H, H)  bf16    stacked MLP weights (resident)
       bmlp_ref:      (L, 1, H)  f32     stacked MLP biases  (resident)
       out_ref:       (TB, H)    f32
    """
    bf = jnp.bfloat16

    # --- MIR layer: two small MXU dots (K = C_in), f32 accumulation ---
    h = jnp.dot(x_ref[...].astype(bf), wx_ref[...],
                preferred_element_type=jnp.float32)
    h = h + jnp.dot(vec_ref[...].astype(bf), wv_ref[...],
                    preferred_element_type=jnp.float32)
    h = _leaky_relu(h + b0_ref[...])

    # --- MLP stack (statically unrolled: trip count known at trace time) ---
    for l in range(wmlp_ref.shape[0]):
        h = jnp.dot(h.astype(bf), wmlp_ref[l],
                    preferred_element_type=jnp.float32) + bmlp_ref[l]
        h = _leaky_relu(h)

    out_ref[...] = h.astype(out_ref.dtype)


# --------------------------------------------------------------------------- #
# One-time parameter packing (outside the per-call path).
# --------------------------------------------------------------------------- #
def pack_params(params, mlp_layers=2):
    H = params["wx"].shape[1]
    L = mlp_layers
    packed = {
        "wx": params["wx"].astype(jnp.bfloat16),                      # (C_in, H)
        "wv": params["wv"].astype(jnp.bfloat16),                      # (C_in, H)
        "b0": params["b0"].reshape(1, H).astype(jnp.float32),         # (1, H)
        "wmlp": jnp.stack([params[f"w{l + 1}"] for l in range(L)],
                          axis=0).astype(jnp.bfloat16),               # (L, H, H)
        "bmlp": jnp.stack([params[f"b{l + 1}"].reshape(1, H)
                           for l in range(L)],
                          axis=0).astype(jnp.float32),                # (L, 1, H)
    }
    return jax.tree_util.tree_map(jnp.asarray, packed)


# --------------------------------------------------------------------------- #
# Wrapper: pallas_call with a 1-D batch grid (edge-masked last block).
# --------------------------------------------------------------------------- #
@jax.jit
def tabular_feature_extractor(x, vec, packed):
    B, C_in = x.shape
    H = packed["wx"].shape[1]
    L = packed["wmlp"].shape[0]

    TB = _choose_tb(B)
    grid = (pl.cdiv(B, TB),)

    out = pl.pallas_call(
        tabular_feature_kernel,
        out_shape=jax.ShapeDtypeStruct((B, H), jnp.float32),
        grid=grid,
        in_specs=[
            pl.BlockSpec((TB, C_in), lambda i: (i, 0)),       # x   (batch-tiled)
            pl.BlockSpec((TB, C_in), lambda i: (i, 0)),       # vec (batch-tiled)
            pl.BlockSpec((C_in, H), lambda i: (0, 0)),        # wx   (resident)
            pl.BlockSpec((C_in, H), lambda i: (0, 0)),        # wv   (resident)
            pl.BlockSpec((1, H), lambda i: (0, 0)),           # b0   (resident)
            pl.BlockSpec((L, H, H), lambda i: (0, 0, 0)),     # wmlp (resident)
            pl.BlockSpec((L, 1, H), lambda i: (0, 0, 0)),     # bmlp (resident)
        ],
        out_specs=pl.BlockSpec((TB, H), lambda i: (i, 0)),    # real H=64 width
        compiler_params=pltpu.CompilerParams(
            dimension_semantics=("parallel",)),               # megacore / v7x
    )(x, vec, packed["wx"], packed["wv"], packed["b0"],
      packed["wmlp"], packed["bmlp"])

    return out


# --------------------------------------------------------------------------- #
# Parameter init (InitWeights_He: kaiming-normal weights, zero biases).
# --------------------------------------------------------------------------- #
def init_params(key, in_channels_T=105, hidden_channels_T=64, mlp_layers=2):
    ks = jax.random.split(key, 2 + mlp_layers)

    def he(k_, fan_in, fan_out):
        std = (2.0 / fan_in) ** 0.5
        # stored as [in, out] so the kernel computes x @ W
        return std * jax.random.normal(k_, (fan_in, fan_out), dtype=jnp.float32)

    H = hidden_channels_T
    p = {
        "wx": he(ks[0], in_channels_T, H),
        "wv": he(ks[1], in_channels_T, H),
        "b0": jnp.zeros((1, H), jnp.float32),
    }
    for l in range(mlp_layers):
        p[f"w{l + 1}"] = he(ks[2 + l], H, H)
        p[f"b{l + 1}"] = jnp.zeros((1, H), jnp.float32)
    return p


# --------------------------------------------------------------------------- #
# References.
# --------------------------------------------------------------------------- #
def _reference_f32(x, vec, p, mlp_layers=2):
    h = _leaky_relu(x @ p["wx"] + vec @ p["wv"] + p["b0"])
    for l in range(mlp_layers):
        h = _leaky_relu(h @ p[f"w{l + 1}"] + p[f"b{l + 1}"])
    return h


def _reference_bf16(x, vec, p, mlp_layers=2):
    """Mirrors the kernel's arithmetic: bf16 matmul operands, f32 accumulation,
    f32 bias adds."""
    bf = jnp.bfloat16

    def mm(a, w):
        return jnp.dot(a.astype(bf), w.astype(bf),
                       preferred_element_type=jnp.float32)

    h = _leaky_relu(mm(x, p["wx"]) + mm(vec, p["wv"]) + p["b0"])
    for l in range(mlp_layers):
        h = _leaky_relu(mm(h, p[f"w{l + 1}"]) + p[f"b{l + 1}"])
    return h


if __name__ == "__main__":
    key = jax.random.PRNGKey(0)
    k_x, k_v, k_p = jax.random.split(key, 3)

    B, C_IN, HIDDEN, L = 8, 105, 64, 2      # module defaults, small batch
    x = jax.random.normal(k_x, (B, C_IN), dtype=jnp.float32)
    vec = jax.random.normal(k_v, (B, C_IN), dtype=jnp.float32)
    params = init_params(k_p, in_channels_T=C_IN, hidden_channels_T=HIDDEN,
                         mlp_layers=L)
    packed = pack_params(params, mlp_layers=L)   # one-time weight packing

    out = tabular_feature_extractor(x, vec, packed)
    out = jax.block_until_ready(out)
    assert out.shape == (B, HIDDEN)

    # exact-arithmetic check (bf16 operands / f32 accumulation, like the kernel)
    ref_q = _reference_bf16(x, vec, params, L)
    assert jnp.allclose(out, ref_q, atol=2e-3, rtol=2e-3), "mismatch vs bf16 ref"
    # sanity check vs full-f32 reference (loose: bf16 MXU inputs)
    ref_f = _reference_f32(x, vec, params, L)
    assert jnp.allclose(out, ref_f, atol=1.5e-1, rtol=1e-1), "mismatch vs f32 ref"

    # B=300: exercises the >=2-step "parallel" grid + edge-masked last block
    B2 = 300
    x2 = jax.random.normal(k_x, (B2, C_IN), dtype=jnp.float32)
    vec2 = jax.random.normal(k_v, (B2, C_IN), dtype=jnp.float32)
    out2 = jax.block_until_ready(tabular_feature_extractor(x2, vec2, packed))
    assert out2.shape == (B2, HIDDEN)
    assert jnp.allclose(out2, _reference_bf16(x2, vec2, params, L),
                        atol=2e-3, rtol=2e-3), "mismatch vs bf16 ref (B=300)"

    # B=2600: multiple 1024-row tiles with a ragged edge block
    B3 = 2600
    x3 = jax.random.normal(k_x, (B3, C_IN), dtype=jnp.float32)
    vec3 = jax.random.normal(k_v, (B3, C_IN), dtype=jnp.float32)
    out3 = jax.block_until_ready(tabular_feature_extractor(x3, vec3, packed))
    assert out3.shape == (B3, HIDDEN)
    assert jnp.allclose(out3, _reference_bf16(x3, vec3, params, L),
                        atol=2e-3, rtol=2e-3), "mismatch vs bf16 ref (B=2600)"

    print("KERNEL_OK")
</pallas_src>

<mosaic_0001>
module attributes {stable_mosaic.version = 11 : i64} {
  func.func @tabular_feature_kernel(%arg0: i32, %arg1: memref<8x105xf32, #tpu.memory_space<vmem>>, %arg2: memref<8x105xf32, #tpu.memory_space<vmem>>, %arg3: memref<105x64xbf16, #tpu.memory_space<vmem>>, %arg4: memref<105x64xbf16, #tpu.memory_space<vmem>>, %arg5: memref<1x64xf32, #tpu.memory_space<vmem>>, %arg6: memref<2x64x64xbf16, #tpu.memory_space<vmem>>, %arg7: memref<2x1x64xf32, #tpu.memory_space<vmem>>, %arg8: memref<8x64xf32, #tpu.memory_space<vmem>>) attributes {dimension_semantics = [#tpu.dimension_semantics<parallel>], iteration_bounds = array<i64: 1>, scalar_prefetch = 0 : i64, scratch_operands = 0 : i64, tpu.core_type = #tpu.core_type<tc>, window_params = [{transform_indices = @transform_0, window_bounds = array<i64: 8, 105>}, {transform_indices = @transform_1, window_bounds = array<i64: 8, 105>}, {pipeline_mode = #tpu.pipeline_mode<synchronous>, transform_indices = @transform_2, window_bounds = array<i64: 105, 64>}, {pipeline_mode = #tpu.pipeline_mode<synchronous>, transform_indices = @transform_3, window_bounds = array<i64: 105, 64>}, {pipeline_mode = #tpu.pipeline_mode<synchronous>, transform_indices = @transform_4, window_bounds = array<i64: 1, 64>}, {pipeline_mode = #tpu.pipeline_mode<synchronous>, transform_indices = @transform_5, window_bounds = array<i64: 2, 64, 64>}, {pipeline_mode = #tpu.pipeline_mode<synchronous>, transform_indices = @transform_6, window_bounds = array<i64: 2, 1, 64>}, {transform_indices = @transform_7, window_bounds = array<i64: 8, 64>}]} {
    %c0 = arith.constant 0 : index
    %c0_0 = arith.constant 0 : index
    %0 = vector.load %arg1[%c0, %c0_0] : memref<8x105xf32, #tpu.memory_space<vmem>>, vector<8x105xf32>
    %1 = arith.truncf %0 : vector<8x105xf32> to vector<8x105xbf16>
    %c0_1 = arith.constant 0 : index
    %c0_2 = arith.constant 0 : index
    %2 = vector.load %arg3[%c0_1, %c0_2] : memref<105x64xbf16, #tpu.memory_space<vmem>>, vector<105x64xbf16>
    %cst = arith.constant dense<0.000000e+00> : vector<8x64xf32>
    %3 = tpu.matmul %1, %2, %cst {dimension_numbers = #tpu.dot_dimension_numbers<[1], [0], [0], [1], [0, 0, 1, 1], [], []>} : vector<8x105xbf16>, vector<105x64xbf16>, vector<8x64xf32> -> vector<8x64xf32>
    %c0_3 = arith.constant 0 : index
    %c0_4 = arith.constant 0 : index
    %4 = vector.load %arg2[%c0_3, %c0_4] : memref<8x105xf32, #tpu.memory_space<vmem>>, vector<8x105xf32>
    %5 = arith.truncf %4 : vector<8x105xf32> to vector<8x105xbf16>
    %c0_5 = arith.constant 0 : index
    %c0_6 = arith.constant 0 : index
    %6 = vector.load %arg4[%c0_5, %c0_6] : memref<105x64xbf16, #tpu.memory_space<vmem>>, vector<105x64xbf16>
    %cst_7 = arith.constant dense<0.000000e+00> : vector<8x64xf32>
    %7 = tpu.matmul %5, %6, %cst_7 {dimension_numbers = #tpu.dot_dimension_numbers<[1], [0], [0], [1], [0, 0, 1, 1], [], []>} : vector<8x105xbf16>, vector<105x64xbf16>, vector<8x64xf32> -> vector<8x64xf32>
    %8 = arith.addf %3, %7 : vector<8x64xf32>
    %c0_8 = arith.constant 0 : index
    %c0_9 = arith.constant 0 : index
    %9 = vector.load %arg5[%c0_8, %c0_9] : memref<1x64xf32, #tpu.memory_space<vmem>>, vector<1x64xf32>
    %10 = vector.broadcast %9 : vector<1x64xf32> to vector<8x64xf32>
    %11 = arith.addf %8, %10 : vector<8x64xf32>
    %cst_10 = arith.constant 0.000000e+00 : f32
    %12 = vector.broadcast %cst_10 : f32 to vector<8x64xf32>
    %13 = arith.cmpf ogt, %11, %12 : vector<8x64xf32>
    %cst_11 = arith.constant 0.00999999977 : f32
    %14 = vector.broadcast %cst_11 : f32 to vector<8x64xf32>
    %15 = arith.mulf %14, %11 : vector<8x64xf32>
    %16 = arith.select %13, %11, %15 : vector<8x64xi1>, vector<8x64xf32>
    %17 = arith.truncf %16 : vector<8x64xf32> to vector<8x64xbf16>
    %c0_12 = arith.constant 0 : index
    %c0_13 = arith.constant 0 : index
    %c0_14 = arith.constant 0 : index
    %18 = vector.load %arg6[%c0_12, %c0_13, %c0_14] : memref<2x64x64xbf16, #tpu.memory_space<vmem>>, vector<1x64x64xbf16>
    %19 = vector.shape_cast %18 : vector<1x64x64xbf16> to vector<64x64xbf16>
    %cst_15 = arith.constant dense<0.000000e+00> : vector<8x64xf32>
    %20 = tpu.matmul %17, %19, %cst_15 {dimension_numbers = #tpu.dot_dimension_numbers<[1], [0], [0], [1], [0, 0, 1, 1], [], []>} : vector<8x64xbf16>, vector<64x64xbf16>, vector<8x64xf32> -> vector<8x64xf32>
    %c0_16 = arith.constant 0 : index
    %c0_17 = arith.constant 0 : index
    %c0_18 = arith.constant 0 : index
    %21 = vector.load %arg7[%c0_16, %c0_17, %c0_18] : memref<2x1x64xf32, #tpu.memory_space<vmem>>, vector<1x1x64xf32>
    %22 = vector.shape_cast %21 : vector<1x1x64xf32> to vector<1x64xf32>
    %23 = vector.broadcast %22 : vector<1x64xf32> to vector<8x64xf32>
    %24 = arith.addf %20, %23 : vector<8x64xf32>
    %cst_19 = arith.constant 0.000000e+00 : f32
    %25 = vector.broadcast %cst_19 : f32 to vector<8x64xf32>
    %26 = arith.cmpf ogt, %24, %25 : vector<8x64xf32>
    %cst_20 = arith.constant 0.00999999977 : f32
    %27 = vector.broadcast %cst_20 : f32 to vector<8x64xf32>
    %28 = arith.mulf %27, %24 : vector<8x64xf32>
    %29 = arith.select %26, %24, %28 : vector<8x64xi1>, vector<8x64xf32>
    %30 = arith.truncf %29 : vector<8x64xf32> to vector<8x64xbf16>
    %c1 = arith.constant 1 : index
    %c0_21 = arith.constant 0 : index
    %c0_22 = arith.constant 0 : index
    %31 = vector.load %arg6[%c1, %c0_21, %c0_22] : memref<2x64x64xbf16, #tpu.memory_space<vmem>>, vector<1x64x64xbf16>
    %32 = vector.shape_cast %31 : vector<1x64x64xbf16> to vector<64x64xbf16>
    %cst_23 = arith.constant dense<0.000000e+00> : vector<8x64xf32>
    %33 = tpu.matmul %30, %32, %cst_23 {dimension_numbers = #tpu.dot_dimension_numbers<[1], [0], [0], [1], [0, 0, 1, 1], [], []>} : vector<8x64xbf16>, vector<64x64xbf16>, vector<8x64xf32> -> vector<8x64xf32>
    %c1_24 = arith.constant 1 : index
    %c0_25 = arith.constant 0 : index
    %c0_26 = arith.constant 0 : index
    %34 = vector.load %arg7[%c1_24, %c0_25, %c0_26] : memref<2x1x64xf32, #tpu.memory_space<vmem>>, vector<1x1x64xf32>
    %35 = vector.shape_cast %34 : vector<1x1x64xf32> to vector<1x64xf32>
    %36 = vector.broadcast %35 : vector<1x64xf32> to vector<8x64xf32>
    %37 = arith.addf %33, %36 : vector<8x64xf32>
    %cst_27 = arith.constant 0.000000e+00 : f32
    %38 = vector.broadcast %cst_27 : f32 to vector<8x64xf32>
    %39 = arith.cmpf ogt, %37, %38 : vector<8x64xf32>
    %cst_28 = arith.constant 0.00999999977 : f32
    %40 = vector.broadcast %cst_28 : f32 to vector<8x64xf32>
    %41 = arith.mulf %40, %37 : vector<8x64xf32>
    %42 = arith.select %39, %37, %41 : vector<8x64xi1>, vector<8x64xf32>
    %c0_29 = arith.constant 0 : index
    %c0_30 = arith.constant 0 : index
    %43 = vector.load %arg8[%c0_29, %c0_30] : memref<8x64xf32, #tpu.memory_space<vmem>>, vector<8x64xf32>
    tpu.vector_store %arg8[%c0_29, %c0_30], %42 {strides = array<i32>} : memref<8x64xf32, #tpu.memory_space<vmem>>, vector<8x64xf32>,
    return
  }
  func.func @transform_0(%arg0: i32) -> (i32, i32) {
    %c0_i32 = arith.constant 0 : i32
    %c0_i32_0 = arith.constant 0 : i32
    return %arg0, %c0_i32 : i32, i32
  }
  func.func @transform_1(%arg0: i32) -> (i32, i32) {
    %c0_i32 = arith.constant 0 : i32
    %c0_i32_0 = arith.constant 0 : i32
    return %arg0, %c0_i32 : i32, i32
  }
  func.func @transform_2(%arg0: i32) -> (i32, i32) {
    %c0_i32 = arith.constant 0 : i32
    %c0_i32_0 = arith.constant 0 : i32
    %c0_i32_1 = arith.constant 0 : i32
    return %c0_i32, %c0_i32_0 : i32, i32
  }
  func.func @transform_3(%arg0: i32) -> (i32, i32) {
    %c0_i32 = arith.constant 0 : i32
    %c0_i32_0 = arith.constant 0 : i32
    %c0_i32_1 = arith.constant 0 : i32
    return %c0_i32, %c0_i32_0 : i32, i32
  }
  func.func @transform_4(%arg0: i32) -> (i32, i32) {
    %c0_i32 = arith.constant 0 : i32
    %c0_i32_0 = arith.constant 0 : i32
    %c0_i32_1 = arith.constant 0 : i32
    return %c0_i32, %c0_i32_0 : i32, i32
  }
  func.func @transform_5(%arg0: i32) -> (i32, i32, i32) {
    %c0_i32 = arith.constant 0 : i32
    %c0_i32_0 = arith.constant 0 : i32
    %c0_i32_1 = arith.constant 0 : i32
    %c0_i32_2 = arith.constant 0 : i32
    return %c0_i32, %c0_i32_0, %c0_i32_1 : i32, i32, i32
  }
  func.func @transform_6(%arg0: i32) -> (i32, i32, i32) {
    %c0_i32 = arith.constant 0 : i32
    %c0_i32_0 = arith.constant 0 : i32
    %c0_i32_1 = arith.constant 0 : i32
    %c0_i32_2 = arith.constant 0 : i32
    return %c0_i32, %c0_i32_0, %c0_i32_1 : i32, i32, i32
  }
  func.func @transform_7(%arg0: i32) -> (i32, i32) {
    %c0_i32 = arith.constant 0 : i32
    %c0_i32_0 = arith.constant 0 : i32
    return %arg0, %c0_i32 : i32, i32
  }
}

</mosaic_0001>

<llo_original>
// kernel: tabular_feature_extractor.1
$region0: #{tabular_feature_extractor.1}
  #allocation0 [shape = 'u32[]', space=smem, size = 0x4, offset = 0x4, fixed_abs, tag = 'smem constant byte address 0x4 - core index']
  #allocation1 [shape = 'u32[144,128]{1,0:T(1,128)}', space=vmem, size = 0x12000, scoped, tag = 'internal scratch']
  %s0 = inlined_call_operand.vmem [shape: f32[8,105], index: 0, kind: input, shape index: {}]
  %s1 = inlined_call_operand.vmem [shape: f32[8,105], index: 1, kind: input, shape index: {}]
  %s2 = inlined_call_operand.vmem [shape: bf16[105,64], index: 2, kind: input, shape index: {}]
  %s3 = inlined_call_operand.vmem [shape: bf16[105,64], index: 3, kind: input, shape index: {}]
  %s4 = inlined_call_operand.vmem [shape: f32[1,64], index: 4, kind: input, shape index: {}]
  %s5 = inlined_call_operand.vmem [shape: bf16[2,64,64], index: 5, kind: input, shape index: {}]
  %s6 = inlined_call_operand.vmem [shape: f32[2,1,64], index: 6, kind: input, shape index: {}]
  %s7 = inlined_call_operand.hbm [shape: f32[8,64], index: 7, kind: output, shape index: {}]
  %s8 = sld [smem:[#allocation0]]
  $region38: #{tabular_feature_extractor.1} parent=0
    _
  %s10 = ssub.s32 1, %s8
  %s11 = scalar_select 0, %s10, %s8
  $region1: #{tabular_feature_extractor.1} parent=0
    #allocation2 [shape = 'u8[4096]{0}', space=vmem, size = 0x1000, scoped, tag = 'output window, operand 0, single buffered']
    #allocation3 [shape = 's32[1]{0}', space=sflag, size = 0x4, scoped, tag = 'scoped memory for tabular_feature_extractor.1']
    %12 = vsyncpa [#allocation3], 0
    // Predicated region
    $region2: #{tabular_feature_extractor.1} parent=1 // pred_check
      _
    $region3: #{tabular_feature_extractor.1} parent=1 // pred_check_branch
      %14 = sbr.rel (0) target = $region5
    $region4: #{tabular_feature_extractor.1} parent=1 // pred_region
      _
    $region5: #{tabular_feature_extractor.1} parent=1 // pred_fallthru
      _
    // Predicated region
    $region6: #{tabular_feature_extractor.1} parent=1 // pred_check
      _
    $region7: #{tabular_feature_extractor.1} parent=1 // pred_check_branch
      %16 = sbr.rel (0) target = $region9
    $region8: #{tabular_feature_extractor.1} parent=1 // pred_region
      _
    $region9: #{tabular_feature_extractor.1} parent=1 // pred_fallthru
      _
    // Predicated region
    $region10: #{tabular_feature_extractor.1} parent=1 // pred_check
      _
    $region11: #{tabular_feature_extractor.1} parent=1 // pred_check_branch
      %18 = sbr.rel (0) target = $region13
    $region12: #{tabular_feature_extractor.1} parent=1 // pred_region
      _
    $region13: #{tabular_feature_extractor.1} parent=1 // pred_fallthru
      _
    // Predicated region
    $region14: #{tabular_feature_extractor.1} parent=1 // pred_check
      _
    $region15: #{tabular_feature_extractor.1} parent=1 // pred_check_branch
      %20 = sbr.rel (0) target = $region17
    $region16: #{tabular_feature_extractor.1} parent=1 // pred_region
      _
    $region17: #{tabular_feature_extractor.1} parent=1 // pred_fallthru
      _
    // Predicated region
    $region18: #{tabular_feature_extractor.1} parent=1 // pred_check
      _
    $region19: #{tabular_feature_extractor.1} parent=1 // pred_check_branch
      %22 = sbr.rel (0) target = $region21
    $region20: #{tabular_feature_extractor.1} parent=1 // pred_region
      _
    $region21: #{tabular_feature_extractor.1} parent=1 // pred_fallthru
      _
    // Predicated region
    $region22: #{tabular_feature_extractor.1} parent=1 // pred_check
      _
    $region23: #{tabular_feature_extractor.1} parent=1 // pred_check_branch
      %24 = sbr.rel (0) target = $region25
    $region24: #{tabular_feature_extractor.1} parent=1 // pred_region
      _
    $region25: #{tabular_feature_extractor.1} parent=1 // pred_fallthru
      _
    // Predicated region
    $region26: #{tabular_feature_extractor.1} parent=1 // pred_check
      _
    $region27: #{tabular_feature_extractor.1} parent=1 // pred_check_branch
      %26 = sbr.rel (0) target = $region29
    $region28: #{tabular_feature_extractor.1} parent=1 // pred_region
      _
    $region29: #{tabular_feature_extractor.1} parent=1 // pred_fallthru
      _
    %v28 = vld [vmem:[%s0] sm:$0xff]
    %v29 = vpack.c.bf16 %v28, %v28
    %v30 = vld [vmem:[%s2] sm:$0xf]
    %v31 = vld [vmem:[%s2 + $0x4] sm:$0xf]
    %v32 = vld [vmem:[%s2 + $0x8] sm:$0xf]
    %v33 = vld [vmem:[%s2 + $0xc] sm:$0xf]
    %v34 = vld [vmem:[%s2 + $0x10] sm:$0xf]
    %v35 = vld [vmem:[%s2 + $0x14] sm:$0xf]
    %v36 = vld [vmem:[%s2 + $0x18] sm:$0xf]
    %v37 = vld [vmem:[%s2 + $0x1c] sm:$0xf]
    %v38 = vld [vmem:[%s2 + $0x20] sm:$0xf]
    %v39 = vld [vmem:[%s2 + $0x24] sm:$0xf]
    %v40 = vld [vmem:[%s2 + $0x28] sm:$0xf]
    %v41 = vld [vmem:[%s2 + $0x2c] sm:$0xf]
    %v42 = vld [vmem:[%s2 + $0x30] sm:$0xf]
    %v43 = vld [vmem:[%s2 + $0x34] sm:$0x1]
    %v44 = vld [vmem:[%s1] sm:$0xff]
    %v45 = vpack.c.bf16 %v44, %v44
    %v46 = vld [vmem:[%s3] sm:$0xf]
    %v47 = vld [vmem:[%s3 + $0x4] sm:$0xf]
    %v48 = vld [vmem:[%s3 + $0x8] sm:$0xf]
    %v49 = vld [vmem:[%s3 + $0xc] sm:$0xf]
    %v50 = vld [vmem:[%s3 + $0x10] sm:$0xf]
    %v51 = vld [vmem:[%s3 + $0x14] sm:$0xf]
    %v52 = vld [vmem:[%s3 + $0x18] sm:$0xf]
    %v53 = vld [vmem:[%s3 + $0x1c] sm:$0xf]
    %v54 = vld [vmem:[%s3 + $0x20] sm:$0xf]
    %v55 = vld [vmem:[%s3 + $0x24] sm:$0xf]
    %v56 = vld [vmem:[%s3 + $0x28] sm:$0xf]
    %v57 = vld [vmem:[%s3 + $0x2c] sm:$0xf]
    %v58 = vld [vmem:[%s3 + $0x30] sm:$0xf]
    %v59 = vld [vmem:[%s3 + $0x34] sm:$0x1]
    %v74 = vunpack.c.l.b16 %v46
    %v75 = vunpack.c.l.b16 %v47
    %v76 = vunpack.c.l.b16 %v48
    %v77 = vunpack.c.l.b16 %v49
    %v78 = vunpack.c.l.b16 %v50
    %v79 = vunpack.c.l.b16 %v51
    %v80 = vunpack.c.l.b16 %v52
    %v81 = vunpack.c.l.b16 %v53
    %v82 = vunpack.c.l.b16 %v54
    %v83 = vunpack.c.l.b16 %v55
    %v84 = vunpack.c.l.b16 %v56
    %v85 = vunpack.c.l.b16 %v57
    %v86 = vunpack.c.l.b16 %v58
    %v87 = vunpack.c.l.b16 %v59
    %v88 = vpack.c.b16 %v75, %v74
    %v89 = vpack.c.b16 %v77, %v76
    %v90 = vpack.c.b16 %v79, %v78
    %v91 = vpack.c.b16 %v81, %v80
    %v92 = vpack.c.b16 %v83, %v82
    %v93 = vpack.c.b16 %v85, %v84
    %v94 = vpack.c.b16 %v87, %v86
    %vm101 = vcmask 859136
    %v103 = vsel %vm101, %v45, 0
    %vm105 = vcmask 1043456
    %vm106 = vcmask 1044480
    %v107 = vsel %vm105, 4294967295, 65535
    %v108 = vsel %vm106, %v107, 0
    %v110 = vand.u32 %v94, %v108
    %112 = vmatprep.subr.bf16.mxu0 0
    %113 = vmatpush1.bf16.msra.mxu0 0
    %114 = vmatprep.subr.bf16.mxu0 0
    %115 = vmatpush1.bf16.msra.mxu0 %v110
    %116 = vmatprep.subr.bf16.mxu0 0
    %117 = vmatpush1.bf16.msra.mxu0 %v93
    %118 = vmatprep.subr.bf16.mxu0 0
    %119 = vmatpush1.bf16.msra.mxu0 %v92
    %120 = vmatprep.subr.bf16.mxu0 0
    %121 = vmatpush1.bf16.msra.mxu0 %v91
    %122 = vmatprep.subr.bf16.mxu0 0
    %123 = vmatpush1.bf16.msra.mxu0 %v90
    %124 = vmatprep.subr.bf16.mxu0 0
    %125 = vmatpush1.bf16.msra.mxu0 %v89
    %126 = vmatprep.subr.bf16.mxu0 0
    %127 = vmatpush1.bf16.msra.mxu0 %v88
    %128 = vmatprep.subr.bf16.mxu0 0
    %129 = vmatpush2.bf16.msra.mxu0 0
    %130 = vmatprep.subr.bf16.mxu0 0
    %131 = vmatpush2.bf16.msra.mxu0 0
    %132 = vmatprep.subr.bf16.mxu0 0
    %133 = vmatpush2.bf16.msra.mxu0 0
    %134 = vmatprep.subr.bf16.mxu0 0
    %135 = vmatpush2.bf16.msra.mxu0 0
    %136 = vmatprep.subr.bf16.mxu0 0
    %137 = vmatpush2.bf16.msra.mxu0 0
    %138 = vmatprep.subr.bf16.mxu0 0
    %139 = vmatpush2.bf16.msra.mxu0 0
    %140 = vmatprep.subr.bf16.mxu0 0
    %141 = vmatpush2.bf16.msra.mxu0 0
    %142 = vmatprep.subr.bf16.mxu0 0
    %143 = vmatpush2.bf16.msra.mxu0 0
    %144 = vmatprep.mubr.bf16.mxu0 0
    %145 = vmatmul.mubr.bf16.gmra.mxu0 %v103
    %v146 = vpop.f32.mrf.mxu0
    %v147 = vadd.f32 0.0, %v146
    %v148 = vpop.f32.mrf.mxu0
    %v149 = vpop.f32.mrf.mxu0
    %v150 = vpop.f32.mrf.mxu0
    %151 = vdwg.mxu0
    %v166 = vunpack.c.l.b16 %v30
    %v167 = vunpack.c.l.b16 %v31
    %v168 = vunpack.c.l.b16 %v32
    %v169 = vunpack.c.l.b16 %v33
    %v170 = vunpack.c.l.b16 %v34
    %v171 = vunpack.c.l.b16 %v35
    %v172 = vunpack.c.l.b16 %v36
    %v173 = vunpack.c.l.b16 %v37
    %v174 = vunpack.c.l.b16 %v38
    %v175 = vunpack.c.l.b16 %v39
    %v176 = vunpack.c.l.b16 %v40
    %v177 = vunpack.c.l.b16 %v41
    %v178 = vunpack.c.l.b16 %v42
    %v179 = vunpack.c.l.b16 %v43
    %v180 = vpack.c.b16 %v167, %v166
    %v181 = vpack.c.b16 %v169, %v168
    %v182 = vpack.c.b16 %v171, %v170
    %v183 = vpack.c.b16 %v173, %v172
    %v184 = vpack.c.b16 %v175, %v174
    %v185 = vpack.c.b16 %v177, %v176
    %v186 = vpack.c.b16 %v179, %v178
    %v194 = vsel %vm101, %v29, 0
    %v197 = vand.u32 %v186, %v108
    %199 = vmatprep.subr.bf16.mxu0 0
    %200 = vmatpush1.bf16.msra.mxu0 0
    %201 = vmatprep.subr.bf16.mxu0 0
    %202 = vmatpush1.bf16.msra.mxu0 %v197
    %203 = vmatprep.subr.bf16.mxu0 0
    %204 = vmatpush1.bf16.msra.mxu0 %v185
    %205 = vmatprep.subr.bf16.mxu0 0
    %206 = vmatpush1.bf16.msra.mxu0 %v184
    %207 = vmatprep.subr.bf16.mxu0 0
    %208 = vmatpush1.bf16.msra.mxu0 %v183
    %209 = vmatprep.subr.bf16.mxu0 0
    %210 = vmatpush1.bf16.msra.mxu0 %v182
    %211 = vmatprep.subr.bf16.mxu0 0
    %212 = vmatpush1.bf16.msra.mxu0 %v181
    %213 = vmatprep.subr.bf16.mxu0 0
    %214 = vmatpush1.bf16.msra.mxu0 %v180
    %215 = vmatprep.subr.bf16.mxu0 0
    %216 = vmatpush2.bf16.msra.mxu0 0
    %217 = vmatprep.subr.bf16.mxu0 0
    %218 = vmatpush2.bf16.msra.mxu0 0
    %219 = vmatprep.subr.bf16.mxu0 0
    %220 = vmatpush2.bf16.msra.mxu0 0
    %221 = vmatprep.subr.bf16.mxu0 0
    %222 = vmatpush2.bf16.msra.mxu0 0
    %223 = vmatprep.subr.bf16.mxu0 0
    %224 = vmatpush2.bf16.msra.mxu0 0
    %225 = vmatprep.subr.bf16.mxu0 0
    %226 = vmatpush2.bf16.msra.mxu0 0
    %227 = vmatprep.subr.bf16.mxu0 0
    %228 = vmatpush2.bf16.msra.mxu0 0
    %229 = vmatprep.subr.bf16.mxu0 0
    %230 = vmatpush2.bf16.msra.mxu0 0
    %231 = vmatprep.mubr.bf16.mxu0 0
    %232 = vmatmul.mubr.bf16.gmra.mxu0 %v194
    %v233 = vpop.f32.mrf.mxu0
    %v234 = vadd.f32 %v147, %v233
    %v235 = vpop.f32.mrf.mxu0
    %v236 = vpop.f32.mrf.mxu0
    %v237 = vpop.f32.mrf.mxu0
    %238 = vdwg.mxu0
    %v239 = vld [vmem:[%s4] sm:$0x1]
    %v241 = vlaneseq
    %v242 = vshrl.u32 %v241, 7
    %v243 = vsub.s32 0, %v242
    %v244 = vrot.slane %v239, %v243
    %v246 = vadd.f32 %v234, %v244
    %vm247 = vcmp.gt.f32.partialorder %v246, 0.0
    %v248 = vmul.f32 %v246, 0.01
    %v249 = vsel %vm247, %v246, %v248
    %v250 = vpack.c.bf16 %v249, %v249
    %v251 = vld [vmem:[%s5] sm:$0xf]
    %v252 = vld [vmem:[%s5 + $0x4] sm:$0xf]
    %v253 = vld [vmem:[%s5 + $0x8] sm:$0xf]
    %v254 = vld [vmem:[%s5 + $0xc] sm:$0xf]
    %v255 = vld [vmem:[%s5 + $0x10] sm:$0xf]
    %v256 = vld [vmem:[%s5 + $0x14] sm:$0xf]
    %v257 = vld [vmem:[%s5 + $0x18] sm:$0xf]
    %v258 = vld [vmem:[%s5 + $0x1c] sm:$0xf]
    %v259 = vld [vmem:[%s6] sm:$0x1]
    %v261 = vlaneseq
    %v262 = vshrl.u32 %v261, 7
    %v263 = vsub.s32 0, %v262
    %v264 = vrot.slane %v259, %v263
    %v274 = vunpack.c.l.b16 %v251
    %v275 = vunpack.c.l.b16 %v252
    %v276 = vunpack.c.l.b16 %v253
    %v277 = vunpack.c.l.b16 %v254
    %v278 = vunpack.c.l.b16 %v255
    %v279 = vunpack.c.l.b16 %v256
    %v280 = vunpack.c.l.b16 %v257
    %v281 = vunpack.c.l.b16 %v258
    %v282 = vpack.c.b16 %v275, %v274
    %v283 = vpack.c.b16 %v277, %v276
    %v284 = vpack.c.b16 %v279, %v278
    %v285 = vpack.c.b16 %v281, %v280
    %vm290 = vcmask 523264
    %v292 = vsel %vm290, %v250, 0
    %294 = vmatprep.subr.bf16.mxu0 0
    %295 = vmatpush1.bf16.msra.mxu0 0
    %296 = vmatprep.subr.bf16.mxu0 0
    %297 = vmatpush1.bf16.msra.mxu0 0
    %298 = vmatprep.subr.bf16.mxu0 0
    %299 = vmatpush1.bf16.msra.mxu0 0
    %300 = vmatprep.subr.bf16.mxu0 0
    %301 = vmatpush1.bf16.msra.mxu0 0
    %302 = vmatprep.subr.bf16.mxu0 0
    %303 = vmatpush1.bf16.msra.mxu0 %v285
    %304 = vmatprep.subr.bf16.mxu0 0
    %305 = vmatpush1.bf16.msra.mxu0 %v284
    %306 = vmatprep.subr.bf16.mxu0 0
    %307 = vmatpush1.bf16.msra.mxu0 %v283
    %308 = vmatprep.subr.bf16.mxu0 0
    %309 = vmatpush1.bf16.msra.mxu0 %v282
    %310 = vmatprep.subr.bf16.mxu0 0
    %311 = vmatpush2.bf16.msra.mxu0 0
    %312 = vmatprep.subr.bf16.mxu0 0
    %313 = vmatpush2.bf16.msra.mxu0 0
    %314 = vmatprep.subr.bf16.mxu0 0
    %315 = vmatpush2.bf16.msra.mxu0 0
    %316 = vmatprep.subr.bf16.mxu0 0
    %317 = vmatpush2.bf16.msra.mxu0 0
    %318 = vmatprep.subr.bf16.mxu0 0
    %319 = vmatpush2.bf16.msra.mxu0 0
    %320 = vmatprep.subr.bf16.mxu0 0
    %321 = vmatpush2.bf16.msra.mxu0 0
    %322 = vmatprep.subr.bf16.mxu0 0
    %323 = vmatpush2.bf16.msra.mxu0 0
    %324 = vmatprep.subr.bf16.mxu0 0
    %325 = vmatpush2.bf16.msra.mxu0 0
    %326 = vmatprep.mubr.bf16.mxu0 0
    %327 = vmatmul.mubr.bf16.gmra.mxu0 %v292
    %v328 = vpop.f32.mrf.mxu0
    %v329 = vadd.f32 %v264, %v328
    %v330 = vpop.f32.mrf.mxu0
    %v331 = vpop.f32.mrf.mxu0
    %v332 = vpop.f32.mrf.mxu0
    %333 = vdwg.mxu0
    %vm334 = vcmp.gt.f32.partialorder %v329, 0.0
    %v335 = vmul.f32 %v329, 0.01
    %v336 = vsel %vm334, %v329, %v335
    %v337 = vpack.c.bf16 %v336, %v336
    %s338 = scalar_lea.vmem %s5, 32
    %v339 = vld [vmem:[%s338] sm:$0xf]
    %v340 = vld [vmem:[%s338 + $0x4] sm:$0xf]
    %v341 = vld [vmem:[%s338 + $0x8] sm:$0xf]
    %v342 = vld [vmem:[%s338 + $0xc] sm:$0xf]
    %v343 = vld [vmem:[%s338 + $0x10] sm:$0xf]
    %v344 = vld [vmem:[%s338 + $0x14] sm:$0xf]
    %v345 = vld [vmem:[%s338 + $0x18] sm:$0xf]
    %v346 = vld [vmem:[%s338 + $0x1c] sm:$0xf]
    %s347 = scalar_lea.vmem %s6, 1
    %v348 = vld [vmem:[%s347] sm:$0x1]
    %v350 = vlaneseq
    %v351 = vshrl.u32 %v350, 7
    %v352 = vsub.s32 0, %v351
    %v353 = vrot.slane %v348, %v352
    %v363 = vunpack.c.l.b16 %v339
    %v364 = vunpack.c.l.b16 %v340
    %v365 = vunpack.c.l.b16 %v341
    %v366 = vunpack.c.l.b16 %v342
    %v367 = vunpack.c.l.b16 %v343
    %v368 = vunpack.c.l.b16 %v344
    %v369 = vunpack.c.l.b16 %v345
    %v370 = vunpack.c.l.b16 %v346
    %v371 = vpack.c.b16 %v364, %v363
    %v372 = vpack.c.b16 %v366, %v365
    %v373 = vpack.c.b16 %v368, %v367
    %v374 = vpack.c.b16 %v370, %v369
    %v380 = vsel %vm290, %v337, 0
    %382 = vmatprep.subr.bf16.mxu0 0
    %383 = vmatpush1.bf16.msra.mxu0 0
    %384 = vmatprep.subr.bf16.mxu0 0
    %385 = vmatpush1.bf16.msra.mxu0 0
    %386 = vmatprep.subr.bf16.mxu0 0
    %387 = vmatpush1.bf16.msra.mxu0 0
    %388 = vmatprep.subr.bf16.mxu0 0
    %389 = vmatpush1.bf16.msra.mxu0 0
    %390 = vmatprep.subr.bf16.mxu0 0
    %391 = vmatpush1.bf16.msra.mxu0 %v374
    %392 = vmatprep.subr.bf16.mxu0 0
    %393 = vmatpush1.bf16.msra.mxu0 %v373
    %394 = vmatprep.subr.bf16.mxu0 0
    %395 = vmatpush1.bf16.msra.mxu0 %v372
    %396 = vmatprep.subr.bf16.mxu0 0
    %397 = vmatpush1.bf16.msra.mxu0 %v371
    %398 = vmatprep.subr.bf16.mxu0 0
    %399 = vmatpush2.bf16.msra.mxu0 0
    %400 = vmatprep.subr.bf16.mxu0 0
    %401 = vmatpush2.bf16.msra.mxu0 0
    %402 = vmatprep.subr.bf16.mxu0 0
    %403 = vmatpush2.bf16.msra.mxu0 0
    %404 = vmatprep.subr.bf16.mxu0 0
    %405 = vmatpush2.bf16.msra.mxu0 0
    %406 = vmatprep.subr.bf16.mxu0 0
    %407 = vmatpush2.bf16.msra.mxu0 0
    %408 = vmatprep.subr.bf16.mxu0 0
    %409 = vmatpush2.bf16.msra.mxu0 0
    %410 = vmatprep.subr.bf16.mxu0 0
    %411 = vmatpush2.bf16.msra.mxu0 0
    %412 = vmatprep.subr.bf16.mxu0 0
    %413 = vmatpush2.bf16.msra.mxu0 0
    %414 = vmatprep.mubr.bf16.mxu0 0
    %415 = vmatmul.mubr.bf16.gmra.mxu0 %v380
    %v416 = vpop.f32.mrf.mxu0
    %v417 = vadd.f32 %v353, %v416
    %v418 = vpop.f32.mrf.mxu0
    %v419 = vpop.f32.mrf.mxu0
    %v420 = vpop.f32.mrf.mxu0
    %421 = vdwg.mxu0
    %vm422 = vcmp.gt.f32.partialorder %v417, 0.0
    %v423 = vmul.f32 %v417, 0.01
    %v424 = vsel %vm422, %v417, %v423
    %425 = vst.msk [vmem:[#allocation2] sm:$0xff] %vm290, %v424
    // Predicated region
    $region30: #{tabular_feature_extractor.1} parent=1 // pred_check
      _
    $region31: #{tabular_feature_extractor.1} parent=1 // pred_check_branch
      %427 = sbr.rel (0) target = $region33
    $region32: #{tabular_feature_extractor.1} parent=1 // pred_region
      %s429 = ssub.s32 128, 128
      %430 = vsyncadd [#allocation3], %s429
      %s432 = sshll.u32 [#allocation2], 4
      %s433 = int_to_ptr.vmem [resolvable:$true] %s432
      %435 = dma.vmem_to_hbm [thread:$0]  %s433, 128, %s7, [#allocation3]
    $region33: #{tabular_feature_extractor.1} parent=1 // pred_fallthru
      _
    // Predicated region
    $region34: #{tabular_feature_extractor.1} parent=1 // pred_check
      _
    $region35: #{tabular_feature_extractor.1} parent=1 // pred_check_branch
      %437 = sbr.rel (0) target = $region37
    $region36: #{tabular_feature_extractor.1} parent=1 // pred_region
      %438 = dma.done [#allocation3], 128
    $region37: #{tabular_feature_extractor.1} parent=1 // pred_fallthru
      _
    %439 = vsyncpa [#allocation3], 1

</llo_original>
